<compile_context>
chip_gen: v5e
topology: v5e:2x2
jax: 0.10.0
libtpu: 0.0.40
codegen_flags: <defaults>
</compile_context>

<pallas_src>
import functools

import jax
import jax.numpy as jnp
from jax.experimental import pallas as pl
from jax.experimental.pallas import tpu as pltpu

# Deterministic "module parameters" (from __init__): lamb, T, triplet margin.
LAMB = 1.0
T = 2.0
MARGIN = 1.0
KD_EPS = 1e-5        # eps used by LwF knowledge_distillation
DIST_EPS = 1e-12     # numerical eps inside sqrt for pairwise distance


def _recip(x):
    # EUP approximate reciprocal + one Newton refinement step: the divide
    # leaves the VPU (separate VLIW slot) while staying ~f32 accurate, which
    # matters because the student normalization feeds a log().
    r = pl.reciprocal(x, approx=True)
    return r * (2.0 - x * r)


def _triplet_lwf_kernel(a_ref, p_ref, n_ref, oa_ref, loss_ref, metric_ref, *,
                        true_b):
    # grid = (num_cores [parallel], tiles_per_core [arbitrary/reduction])
    i = pl.program_id(1)

    # Per-core resident (1,1,1) accumulators: zero on the first reduction step.
    @pl.when(i == 0)
    def _init():
        loss_ref[...] = jnp.zeros_like(loss_ref)
        metric_ref[...] = jnp.zeros_like(metric_ref)

    # Per-tile loads (cast to f32 in-kernel so bf16 inputs stay bf16 over HBM).
    a = a_ref[...].astype(jnp.float32)
    p = p_ref[...].astype(jnp.float32)
    n = n_ref[...].astype(jnp.float32)
    oa = oa_ref[...].astype(jnp.float32)

    tb, d = a.shape

    # Row-validity mask: rows beyond the true batch (padding) contribute zero.
    tile_idx = pl.program_id(0) * pl.num_programs(1) + i
    row0 = tile_idx * tb
    rows = row0 + jax.lax.broadcasted_iota(jnp.int32, (tb, 1), 0)
    valid = (rows < true_b).astype(jnp.float32)                    # (TB, 1)

    # ---- Triplet margin loss (p=2) + ranking metric ------------------------
    dap_sq = jnp.sum((a - p) ** 2, axis=1, keepdims=True)          # (TB, 1)
    dan_sq = jnp.sum((a - n) ** 2, axis=1, keepdims=True)          # (TB, 1)
    d_ap = jnp.sqrt(dap_sq + DIST_EPS)
    d_an = jnp.sqrt(dan_sq + DIST_EPS)
    trip = jnp.maximum(d_ap - d_an + MARGIN, 0.0)                  # (TB, 1)
    # sqrt is monotonic -> compare squared distances directly.
    hit = (dan_sq > dap_sq).astype(jnp.float32)                    # (TB, 1)

    # ---- LwF knowledge distillation (exp = 1/T) -----------------------------
    # renorm(softmax(x)^(1/T)) == softmax(x / T): one stabilized softmax each.
    inv_t = 1.0 / T

    def softmax_t(x):
        z = x * inv_t
        z = z - jnp.max(z, axis=1, keepdims=True)
        e = jnp.exp(z)
        return e * _recip(jnp.sum(e, axis=1, keepdims=True))

    out = softmax_t(a)      # student (anchor)
    tar = softmax_t(oa)     # teacher (old_anchor)
    out = out + KD_EPS / d
    out = out * _recip(jnp.sum(out, axis=1, keepdims=True))
    ce = -jnp.sum(tar * jnp.log(out), axis=1, keepdims=True)       # (TB, 1)

    # Fold lamb into the running per-core sum (mask padded rows first).
    loss_ref[...] += jnp.sum(valid * (trip + LAMB * ce),
                             keepdims=True).reshape(1, 1, 1)
    metric_ref[...] += jnp.sum(valid * hit, keepdims=True).reshape(1, 1, 1)


def _round_up(x, m):
    return ((x + m - 1) // m) * m


def _detect_num_cores():
    """Number of TensorCores per chip (2 on v7x), clamped to [1, 2]."""
    try:
        dev = jax.devices()[0]
        for attr in ("num_cores", "core_count"):
            v = getattr(dev, attr, None)
            if isinstance(v, int) and v > 0:
                return max(1, min(2, v))
    except Exception:
        pass
    return 1


def _vmem_capacity_guess():
    """Best-effort VMEM capacity; falls back to the smallest (v7x, 64 MiB)."""
    try:
        info = pltpu.get_tpu_info()
        for attr in ("vmem_capacity_bytes", "vmem_bytes", "vmem_size_bytes"):
            v = getattr(info, attr, None)
            if isinstance(v, int) and v > 0:
                return v
    except Exception:
        pass
    return 64 << 20


def triplet_lwf(anchor, positive, negative, old_anchor, *, block_b=None,
                num_cores=None):
    """Returns (loss, metric) scalars; all inputs are [B, D] (f32 or bf16)."""
    b, d = anchor.shape
    itemsize = jnp.dtype(anchor.dtype).itemsize
    # Sub-32-bit dtypes pack along sublanes: 16-row alignment for bf16, 8 f32.
    row_align = max(8, 32 // itemsize)

    if num_cores is None:
        num_cores = _detect_num_cores()

    vmem_cap = _vmem_capacity_guess()
    if block_b is None:
        # Byte budget: 4 inputs x 2 pipeline buffers x block_b x D x itemsize
        # ~= vmem/8  (16 MiB on v5e/v6e, 8 MiB on v7x).
        budget = vmem_cap // 8
        cap = max(row_align,
                  (budget // (8 * d * itemsize)) // row_align * row_align)
        per_core_rows = -(-b // num_cores)
        block_b = min(cap, _round_up(per_core_rows, row_align))
    block_b = max(row_align, _round_up(block_b, row_align))

    tiles_per_core = -(-b // (num_cores * block_b))
    padded_b = num_cores * tiles_per_core * block_b

    def pad(x):
        if padded_b == b:
            return x
        return jnp.pad(x, ((0, padded_b - b), (0, 0)))

    a, p, n, oa = (pad(x) for x in (anchor, positive, negative, old_anchor))

    in_spec = pl.BlockSpec((block_b, d),
                           lambda c, i: (c * tiles_per_core + i, 0))
    # Per-core resident partial-sum block: index depends only on the core axis.
    out_spec = pl.BlockSpec((1, 1, 1), lambda c, i: (c, 0, 0))

    # Raise the scoped VMEM limit so the byte-budgeted tiles are honoured.
    db_bytes = 4 * 2 * block_b * d * itemsize
    vmem_limit = int(min(max(32 << 20, db_bytes + (8 << 20)),
                         (3 * vmem_cap) // 4))

    loss_p, metric_p = pl.pallas_call(
        functools.partial(_triplet_lwf_kernel, true_b=b),
        out_shape=(
            jax.ShapeDtypeStruct((num_cores, 1, 1), jnp.float32),
            jax.ShapeDtypeStruct((num_cores, 1, 1), jnp.float32),
        ),
        grid=(num_cores, tiles_per_core),
        in_specs=[in_spec, in_spec, in_spec, in_spec],
        out_specs=(out_spec, out_spec),
        compiler_params=pltpu.CompilerParams(
            dimension_semantics=("parallel", "arbitrary"),
            vmem_limit_bytes=vmem_limit),
    )(a, p, n, oa)

    inv_b = 1.0 / b
    return jnp.sum(loss_p) * inv_b, jnp.sum(metric_p) * inv_b


def _reference(anchor, positive, negative, old_anchor):
    # Pure-JAX reference (kept in the original, non-simplified LwF form).
    a, p, n, oa = (x.astype(jnp.float32)
                   for x in (anchor, positive, negative, old_anchor))
    d_ap = jnp.sqrt(jnp.sum((a - p) ** 2, axis=1) + DIST_EPS)
    d_an = jnp.sqrt(jnp.sum((a - n) ** 2, axis=1) + DIST_EPS)
    triplet_loss = jnp.mean(jnp.maximum(d_ap - d_an + MARGIN, 0.0))
    metric = jnp.mean((d_an > d_ap).astype(jnp.float32))
    exp = 1.0 / T

    def softened(x):
        sm = jax.nn.softmax(x, axis=1) ** exp
        return sm / jnp.sum(sm, axis=1, keepdims=True)

    out = softened(a)
    tar = softened(oa)
    out = out + KD_EPS / a.shape[1]
    out = out / jnp.sum(out, axis=1, keepdims=True)
    loss_dist = jnp.mean(-jnp.sum(tar * jnp.log(out), axis=1))
    return triplet_loss + LAMB * loss_dist, metric


if __name__ == "__main__":
    key = jax.random.PRNGKey(0)

    # --- Test 1: aligned batch, auto-configured tile / core count ------------
    B, D = 64, 128
    k1, k2, k3, k4, k5 = jax.random.split(key, 5)
    anchor = jax.random.normal(k1, (B, D), dtype=jnp.float32)
    positive = jax.random.normal(k2, (B, D), dtype=jnp.float32)
    negative = jax.random.normal(k3, (B, D), dtype=jnp.float32)
    old_anchor = jax.random.normal(k4, (B, D), dtype=jnp.float32)

    loss, metric = triplet_lwf(anchor, positive, negative, old_anchor)
    jax.block_until_ready((loss, metric))
    ref_loss, ref_metric = _reference(anchor, positive, negative, old_anchor)
    assert jnp.allclose(loss, ref_loss, atol=1e-4, rtol=1e-4), (loss, ref_loss)
    assert jnp.allclose(metric, ref_metric, atol=1e-6), (metric, ref_metric)

    # --- Test 2: awkward batch (padding + mask) + forced 2-core partials ------
    B2 = 60  # not a multiple of block_b -> exercises padding + row mask
    a2 = jax.random.normal(k5, (B2, D), dtype=jnp.float32)
    p2 = positive[:B2]
    n2 = negative[:B2]
    oa2 = old_anchor[:B2]
    loss2, metric2 = triplet_lwf(a2, p2, n2, oa2, block_b=16, num_cores=2)
    jax.block_until_ready((loss2, metric2))
    ref_loss2, ref_metric2 = _reference(a2, p2, n2, oa2)
    assert jnp.allclose(loss2, ref_loss2, atol=1e-4, rtol=1e-4), (loss2,
                                                                  ref_loss2)
    assert jnp.allclose(metric2, ref_metric2, atol=1e-6), (metric2,
                                                           ref_metric2)

    print("KERNEL_OK")
</pallas_src>

<mosaic_0001>
module attributes {stable_mosaic.version = 11 : i64} {
  func.func @_triplet_lwf_kernel(%arg0: i32, %arg1: i32, %arg2: memref<64x128xf32, #tpu.memory_space<vmem>>, %arg3: memref<64x128xf32, #tpu.memory_space<vmem>>, %arg4: memref<64x128xf32, #tpu.memory_space<vmem>>, %arg5: memref<64x128xf32, #tpu.memory_space<vmem>>, %arg6: memref<1x1x1xf32, #tpu.memory_space<vmem>>, %arg7: memref<1x1x1xf32, #tpu.memory_space<vmem>>) attributes {dimension_semantics = [#tpu.dimension_semantics<parallel>, #tpu.dimension_semantics<arbitrary>], iteration_bounds = array<i64: 1, 1>, scalar_prefetch = 0 : i64, scratch_operands = 0 : i64, tpu.core_type = #tpu.core_type<tc>, window_params = [{transform_indices = @transform_0, window_bounds = array<i64: 64, 128>}, {transform_indices = @transform_1, window_bounds = array<i64: 64, 128>}, {transform_indices = @transform_2, window_bounds = array<i64: 64, 128>}, {transform_indices = @transform_3, window_bounds = array<i64: 64, 128>}, {transform_indices = @transform_4, window_bounds = array<i64: 1, 1, 1>}, {transform_indices = @transform_5, window_bounds = array<i64: 1, 1, 1>}]} {
    %c0_i32 = arith.constant 0 : i32
    %0 = arith.cmpi eq, %arg1, %c0_i32 : i32
    %1 = arith.extui %0 : i1 to i32
    %c0_i32_0 = arith.constant 0 : i32
    %2 = arith.cmpi ne, %1, %c0_i32_0 : i32
    scf.if %2 {
      %cst_42 = arith.constant 0.000000e+00 : f32
      %111 = vector.broadcast %cst_42 : f32 to vector<1x1x1xf32>
      %c0_43 = arith.constant 0 : index
      %c0_44 = arith.constant 0 : index
      %c0_45 = arith.constant 0 : index
      %112 = vector.load %arg6[%c0_43, %c0_44, %c0_45] : memref<1x1x1xf32, #tpu.memory_space<vmem>>, vector<1x1x1xf32>
      tpu.vector_store %arg6[%c0_43, %c0_44, %c0_45], %111 {strides = array<i32>} : memref<1x1x1xf32, #tpu.memory_space<vmem>>, vector<1x1x1xf32>,
      %cst_46 = arith.constant 0.000000e+00 : f32
      %113 = vector.broadcast %cst_46 : f32 to vector<1x1x1xf32>
      %c0_47 = arith.constant 0 : index
      %c0_48 = arith.constant 0 : index
      %c0_49 = arith.constant 0 : index
      %114 = vector.load %arg7[%c0_47, %c0_48, %c0_49] : memref<1x1x1xf32, #tpu.memory_space<vmem>>, vector<1x1x1xf32>
      tpu.vector_store %arg7[%c0_47, %c0_48, %c0_49], %113 {strides = array<i32>} : memref<1x1x1xf32, #tpu.memory_space<vmem>>, vector<1x1x1xf32>,
    } else {
    }
    %c0 = arith.constant 0 : index
    %c0_1 = arith.constant 0 : index
    %3 = vector.load %arg2[%c0, %c0_1] : memref<64x128xf32, #tpu.memory_space<vmem>>, vector<64x128xf32>
    %c0_2 = arith.constant 0 : index
    %c0_3 = arith.constant 0 : index
    %4 = vector.load %arg3[%c0_2, %c0_3] : memref<64x128xf32, #tpu.memory_space<vmem>>, vector<64x128xf32>
    %c0_4 = arith.constant 0 : index
    %c0_5 = arith.constant 0 : index
    %5 = vector.load %arg4[%c0_4, %c0_5] : memref<64x128xf32, #tpu.memory_space<vmem>>, vector<64x128xf32>
    %c0_6 = arith.constant 0 : index
    %c0_7 = arith.constant 0 : index
    %6 = vector.load %arg5[%c0_6, %c0_7] : memref<64x128xf32, #tpu.memory_space<vmem>>, vector<64x128xf32>
    %c1_i32 = arith.constant 1 : i32
    %7 = arith.muli %arg0, %c1_i32 : i32
    %8 = arith.addi %7, %arg1 : i32
    %c64_i32 = arith.constant 64 : i32
    %9 = arith.muli %8, %c64_i32 : i32
    %10 = tpu.iota {dimensions = array<i32: 0>} : vector<64x1xi32>
    %11 = vector.broadcast %9 : i32 to vector<64x1xi32>
    %12 = arith.addi %11, %10 : vector<64x1xi32>
    %c64_i32_8 = arith.constant 64 : i32
    %13 = vector.broadcast %c64_i32_8 : i32 to vector<64x1xi32>
    %14 = arith.cmpi slt, %12, %13 : vector<64x1xi32>
    %15 = arith.extui %14 : vector<64x1xi1> to vector<64x1xi32>
    %16 = arith.sitofp %15 : vector<64x1xi32> to vector<64x1xf32>
    %17 = arith.subf %3, %4 : vector<64x128xf32>
    %18 = arith.mulf %17, %17 : vector<64x128xf32>
    %cst = arith.constant dense<0.000000e+00> : vector<64xf32>
    %19 = vector.multi_reduction <add>, %18, %cst [1] : vector<64x128xf32> to vector<64xf32>
    %20 = vector.shape_cast %19 : vector<64xf32> to vector<64x1xf32>
    %21 = arith.subf %3, %5 : vector<64x128xf32>
    %22 = arith.mulf %21, %21 : vector<64x128xf32>
    %cst_9 = arith.constant dense<0.000000e+00> : vector<64xf32>
    %23 = vector.multi_reduction <add>, %22, %cst_9 [1] : vector<64x128xf32> to vector<64xf32>
    %24 = vector.shape_cast %23 : vector<64xf32> to vector<64x1xf32>
    %cst_10 = arith.constant 9.99999996E-13 : f32
    %25 = vector.broadcast %cst_10 : f32 to vector<64x1xf32>
    %26 = arith.addf %20, %25 : vector<64x1xf32>
    %27 = math.sqrt %26 : vector<64x1xf32>
    %cst_11 = arith.constant 9.99999996E-13 : f32
    %28 = vector.broadcast %cst_11 : f32 to vector<64x1xf32>
    %29 = arith.addf %24, %28 : vector<64x1xf32>
    %30 = math.sqrt %29 : vector<64x1xf32>
    %31 = arith.subf %27, %30 : vector<64x1xf32>
    %cst_12 = arith.constant 1.000000e+00 : f32
    %32 = vector.broadcast %cst_12 : f32 to vector<64x1xf32>
    %33 = arith.addf %31, %32 : vector<64x1xf32>
    %cst_13 = arith.constant 0.000000e+00 : f32
    %34 = vector.broadcast %cst_13 : f32 to vector<64x1xf32>
    %35 = arith.maximumf %33, %34 : vector<64x1xf32>
    %36 = arith.cmpf ogt, %24, %20 : vector<64x1xf32>
    %37 = arith.extui %36 : vector<64x1xi1> to vector<64x1xi32>
    %38 = arith.sitofp %37 : vector<64x1xi32> to vector<64x1xf32>
    %cst_14 = arith.constant 5.000000e-01 : f32
    %39 = vector.broadcast %cst_14 : f32 to vector<64x128xf32>
    %40 = arith.mulf %3, %39 : vector<64x128xf32>
    %cst_15 = arith.constant dense<0xFF800000> : vector<64xf32>
    %41 = vector.multi_reduction <maximumf>, %40, %cst_15 [1] : vector<64x128xf32> to vector<64xf32>
    %42 = vector.shape_cast %41 : vector<64xf32> to vector<64x1xf32>
    %43 = vector.broadcast %42 : vector<64x1xf32> to vector<64x128xf32>
    %44 = arith.subf %40, %43 : vector<64x128xf32>
    %45 = math.exp %44 : vector<64x128xf32>
    %cst_16 = arith.constant dense<0.000000e+00> : vector<64xf32>
    %46 = vector.multi_reduction <add>, %45, %cst_16 [1] : vector<64x128xf32> to vector<64xf32>
    %47 = vector.shape_cast %46 : vector<64xf32> to vector<64x1xf32>
    %48 = tpu.reciprocal %47 {approx = true} : vector<64x1xf32> -> vector<64x1xf32>
    %49 = arith.mulf %47, %48 : vector<64x1xf32>
    %cst_17 = arith.constant 2.000000e+00 : f32
    %50 = vector.broadcast %cst_17 : f32 to vector<64x1xf32>
    %51 = arith.subf %50, %49 : vector<64x1xf32>
    %52 = arith.mulf %48, %51 : vector<64x1xf32>
    %53 = vector.broadcast %52 : vector<64x1xf32> to vector<64x128xf32>
    %54 = arith.mulf %45, %53 : vector<64x128xf32>
    %cst_18 = arith.constant 5.000000e-01 : f32
    %55 = vector.broadcast %cst_18 : f32 to vector<64x128xf32>
    %56 = arith.mulf %6, %55 : vector<64x128xf32>
    %cst_19 = arith.constant dense<0xFF800000> : vector<64xf32>
    %57 = vector.multi_reduction <maximumf>, %56, %cst_19 [1] : vector<64x128xf32> to vector<64xf32>
    %58 = vector.shape_cast %57 : vector<64xf32> to vector<64x1xf32>
    %59 = vector.broadcast %58 : vector<64x1xf32> to vector<64x128xf32>
    %60 = arith.subf %56, %59 : vector<64x128xf32>
    %61 = math.exp %60 : vector<64x128xf32>
    %cst_20 = arith.constant dense<0.000000e+00> : vector<64xf32>
    %62 = vector.multi_reduction <add>, %61, %cst_20 [1] : vector<64x128xf32> to vector<64xf32>
    %63 = vector.shape_cast %62 : vector<64xf32> to vector<64x1xf32>
    %64 = tpu.reciprocal %63 {approx = true} : vector<64x1xf32> -> vector<64x1xf32>
    %65 = arith.mulf %63, %64 : vector<64x1xf32>
    %cst_21 = arith.constant 2.000000e+00 : f32
    %66 = vector.broadcast %cst_21 : f32 to vector<64x1xf32>
    %67 = arith.subf %66, %65 : vector<64x1xf32>
    %68 = arith.mulf %64, %67 : vector<64x1xf32>
    %69 = vector.broadcast %68 : vector<64x1xf32> to vector<64x128xf32>
    %70 = arith.mulf %61, %69 : vector<64x128xf32>
    %cst_22 = arith.constant 7.812500e-08 : f32
    %71 = vector.broadcast %cst_22 : f32 to vector<64x128xf32>
    %72 = arith.addf %54, %71 : vector<64x128xf32>
    %cst_23 = arith.constant dense<0.000000e+00> : vector<64xf32>
    %73 = vector.multi_reduction <add>, %72, %cst_23 [1] : vector<64x128xf32> to vector<64xf32>
    %74 = vector.shape_cast %73 : vector<64xf32> to vector<64x1xf32>
    %75 = tpu.reciprocal %74 {approx = true} : vector<64x1xf32> -> vector<64x1xf32>
    %76 = arith.mulf %74, %75 : vector<64x1xf32>
    %cst_24 = arith.constant 2.000000e+00 : f32
    %77 = vector.broadcast %cst_24 : f32 to vector<64x1xf32>
    %78 = arith.subf %77, %76 : vector<64x1xf32>
    %79 = arith.mulf %75, %78 : vector<64x1xf32>
    %80 = vector.broadcast %79 : vector<64x1xf32> to vector<64x128xf32>
    %81 = arith.mulf %72, %80 : vector<64x128xf32>
    %82 = math.log %81 : vector<64x128xf32>
    %83 = arith.mulf %70, %82 : vector<64x128xf32>
    %cst_25 = arith.constant dense<0.000000e+00> : vector<64xf32>
    %84 = vector.multi_reduction <add>, %83, %cst_25 [1] : vector<64x128xf32> to vector<64xf32>
    %85 = vector.shape_cast %84 : vector<64xf32> to vector<64x1xf32>
    %cst_26 = arith.constant 0.000000e+00 : f32
    %86 = vector.broadcast %cst_26 : f32 to vector<64x1xf32>
    %87 = arith.subf %86, %85 : vector<64x1xf32>
    %c0_27 = arith.constant 0 : index
    %c0_28 = arith.constant 0 : index
    %c0_29 = arith.constant 0 : index
    %88 = vector.load %arg6[%c0_27, %c0_28, %c0_29] : memref<1x1x1xf32, #tpu.memory_space<vmem>>, vector<1x1x1xf32>
    %cst_30 = arith.constant 1.000000e+00 : f32
    %89 = vector.broadcast %cst_30 : f32 to vector<64x1xf32>
    %90 = arith.mulf %89, %87 : vector<64x1xf32>
    %91 = arith.addf %35, %90 : vector<64x1xf32>
    %92 = arith.mulf %16, %91 : vector<64x1xf32>
    %93 = vector.shape_cast %92 : vector<64x1xf32> to vector<1x64x1xf32>
    %cst_31 = arith.constant dense<0.000000e+00> : vector<1xf32>
    %94 = vector.multi_reduction <add>, %93, %cst_31 [1, 2] : vector<1x64x1xf32> to vector<1xf32>
    %95 = vector.shape_cast %94 : vector<1xf32> to vector<1x1x1xf32>
    %96 = vector.extract %95[0, 0, 0] : f32 from vector<1x1x1xf32>
    %97 = vector.broadcast %96 : f32 to vector<1x1xf32>
    %98 = vector.shape_cast %97 : vector<1x1xf32> to vector<1x1x1xf32>
    %99 = arith.addf %88, %98 : vector<1x1x1xf32>
    %c0_32 = arith.constant 0 : index
    %c0_33 = arith.constant 0 : index
    %c0_34 = arith.constant 0 : index
    %100 = vector.load %arg6[%c0_32, %c0_33, %c0_34] : memref<1x1x1xf32, #tpu.memory_space<vmem>>, vector<1x1x1xf32>
    tpu.vector_store %arg6[%c0_32, %c0_33, %c0_34], %99 {strides = array<i32>} : memref<1x1x1xf32, #tpu.memory_space<vmem>>, vector<1x1x1xf32>,
    %c0_35 = arith.constant 0 : index
    %c0_36 = arith.constant 0 : index
    %c0_37 = arith.constant 0 : index
    %101 = vector.load %arg7[%c0_35, %c0_36, %c0_37] : memref<1x1x1xf32, #tpu.memory_space<vmem>>, vector<1x1x1xf32>
    %102 = arith.mulf %16, %38 : vector<64x1xf32>
    %103 = vector.shape_cast %102 : vector<64x1xf32> to vector<1x64x1xf32>
    %cst_38 = arith.constant dense<0.000000e+00> : vector<1xf32>
    %104 = vector.multi_reduction <add>, %103, %cst_38 [1, 2] : vector<1x64x1xf32> to vector<1xf32>
    %105 = vector.shape_cast %104 : vector<1xf32> to vector<1x1x1xf32>
    %106 = vector.extract %105[0, 0, 0] : f32 from vector<1x1x1xf32>
    %107 = vector.broadcast %106 : f32 to vector<1x1xf32>
    %108 = vector.shape_cast %107 : vector<1x1xf32> to vector<1x1x1xf32>
    %109 = arith.addf %101, %108 : vector<1x1x1xf32>
    %c0_39 = arith.constant 0 : index
    %c0_40 = arith.constant 0 : index
    %c0_41 = arith.constant 0 : index
    %110 = vector.load %arg7[%c0_39, %c0_40, %c0_41] : memref<1x1x1xf32, #tpu.memory_space<vmem>>, vector<1x1x1xf32>
    tpu.vector_store %arg7[%c0_39, %c0_40, %c0_41], %109 {strides = array<i32>} : memref<1x1x1xf32, #tpu.memory_space<vmem>>, vector<1x1x1xf32>,
    return
  }
  func.func @transform_0(%arg0: i32, %arg1: i32) -> (i32, i32) {
    %c1_i32 = arith.constant 1 : i32
    %0 = arith.muli %arg0, %c1_i32 : i32
    %1 = arith.addi %0, %arg1 : i32
    %c0_i32 = arith.constant 0 : i32
    %c0_i32_0 = arith.constant 0 : i32
    return %1, %c0_i32 : i32, i32
  }
  func.func @transform_1(%arg0: i32, %arg1: i32) -> (i32, i32) {
    %c1_i32 = arith.constant 1 : i32
    %0 = arith.muli %arg0, %c1_i32 : i32
    %1 = arith.addi %0, %arg1 : i32
    %c0_i32 = arith.constant 0 : i32
    %c0_i32_0 = arith.constant 0 : i32
    return %1, %c0_i32 : i32, i32
  }
  func.func @transform_2(%arg0: i32, %arg1: i32) -> (i32, i32) {
    %c1_i32 = arith.constant 1 : i32
    %0 = arith.muli %arg0, %c1_i32 : i32
    %1 = arith.addi %0, %arg1 : i32
    %c0_i32 = arith.constant 0 : i32
    %c0_i32_0 = arith.constant 0 : i32
    return %1, %c0_i32 : i32, i32
  }
  func.func @transform_3(%arg0: i32, %arg1: i32) -> (i32, i32) {
    %c1_i32 = arith.constant 1 : i32
    %0 = arith.muli %arg0, %c1_i32 : i32
    %1 = arith.addi %0, %arg1 : i32
    %c0_i32 = arith.constant 0 : i32
    %c0_i32_0 = arith.constant 0 : i32
    return %1, %c0_i32 : i32, i32
  }
  func.func @transform_4(%arg0: i32, %arg1: i32) -> (i32, i32, i32) {
    %c0_i32 = arith.constant 0 : i32
    %c0_i32_0 = arith.constant 0 : i32
    %c0_i32_1 = arith.constant 0 : i32
    return %arg0, %c0_i32, %c0_i32_0 : i32, i32, i32
  }
  func.func @transform_5(%arg0: i32, %arg1: i32) -> (i32, i32, i32) {
    %c0_i32 = arith.constant 0 : i32
    %c0_i32_0 = arith.constant 0 : i32
    %c0_i32_1 = arith.constant 0 : i32
    return %arg0, %c0_i32, %c0_i32_0 : i32, i32, i32
  }
}

</mosaic_0001>

<llo_original>
// kernel: tpu_custom_call.1
$region0: #{tpu_custom_call.1}
  #allocation0 [shape = 'u32[]', space=smem, size = 0x4, offset = 0x4, fixed_abs, tag = 'smem constant byte address 0x4 - core index']
  #allocation1 [shape = 'u32[72,128]{1,0:T(1,128)}', space=vmem, size = 0x9000, scoped, tag = 'internal scratch']
  %s0 = inlined_call_operand.hbm [shape: f32[64,128], index: 0, kind: input, shape index: {}]
  %s1 = inlined_call_operand.hbm [shape: f32[64,128], index: 1, kind: input, shape index: {}]
  %s2 = inlined_call_operand.hbm [shape: f32[64,128], index: 2, kind: input, shape index: {}]
  %s3 = inlined_call_operand.hbm [shape: f32[64,128], index: 3, kind: input, shape index: {}]
  %s4 = inlined_call_operand.hbm [shape: f32[1,1,1], index: 4, kind: output, shape index: {0}]
  %s5 = inlined_call_operand.hbm [shape: f32[1,1,1], index: 5, kind: output, shape index: {1}]
  %6 = xla_tuple %s4, %s5
  %s7 = sld [smem:[#allocation0]]
  $region54: #{tpu_custom_call.1} parent=0
    _
  %s9 = ssub.s32 1, %s7
  %s10 = scalar_select 0, %s9, %s7
  $region1: #{tpu_custom_call.1} parent=0
    #allocation2 [shape = 'u8[32768]{0}', space=vmem, size = 0x8000, scoped, tag = 'input window, operand 0, single buffered']
    #allocation3 [shape = 's32[1]{0}', space=sflag, size = 0x4, scoped, tag = 'scoped memory for tpu_custom_call.1']
    #allocation4 [shape = 's32[1]{0}', space=sflag, size = 0x4, scoped, tag = 'scoped memory for tpu_custom_call.1']
    #allocation5 [shape = 'u8[32768]{0}', space=vmem, size = 0x8000, scoped, tag = 'input window, operand 1, single buffered']
    #allocation6 [shape = 's32[1]{0}', space=sflag, size = 0x4, scoped, tag = 'scoped memory for tpu_custom_call.1']
    #allocation7 [shape = 'u8[32768]{0}', space=vmem, size = 0x8000, scoped, tag = 'input window, operand 2, single buffered']
    #allocation8 [shape = 'u8[32768]{0}', space=vmem, size = 0x8000, scoped, tag = 'input window, operand 3, single buffered']
    #allocation9 [shape = 's32[1]{0}', space=sflag, size = 0x4, scoped, tag = 'scoped memory for tpu_custom_call.1']
    #allocation10 [shape = 'u8[512]{0}', space=vmem, size = 0x400, scoped, tag = 'output window, operand 0, single buffered']
    #allocation11 [shape = 'u8[512]{0}', space=vmem, size = 0x400, scoped, tag = 'output window, operand 1, single buffered']
    #allocation12 [shape = 's32[1]{0}', space=sflag, size = 0x4, scoped, tag = 'scoped memory for tpu_custom_call.1']
    %11 = vsyncpa [#allocation3], 0
    %12 = vsyncpa [#allocation6], 0
    %13 = vsyncpa [#allocation9], 0
    %14 = vsyncpa [#allocation4], 0
    %15 = vsyncpa [#allocation12], 0
    // Predicated region
    $region2: #{tpu_custom_call.1} parent=1 // pred_check
      _
    $region3: #{tpu_custom_call.1} parent=1 // pred_check_branch
      %17 = sbr.rel (0) target = $region5
    $region4: #{tpu_custom_call.1} parent=1 // pred_region
      %s18 = sadd.s32 0, 0
      %s19 = smul.u32 8, %s18
      %21 = vsyncadd [#allocation3], 0
      %s22 = smul.addr %s19, 8
      %s23 = scalar_lea.hbm %s0, %s22
      %s24 = sshll.u32 %s23, 4
      %s25 = int_to_ptr.hbm [resolvable:$true] %s24
      %s26 = sshll.u32 [#allocation2], 4
      %s27 = int_to_ptr.vmem [resolvable:$true] %s26
      %32 = dma.hbm_to_vmem [thread:$0]  %s25, 1024, %s27, [#allocation3], 128, 128, 8
    $region5: #{tpu_custom_call.1} parent=1 // pred_fallthru
      _
    // Predicated region
    $region6: #{tpu_custom_call.1} parent=1 // pred_check
      _
    $region7: #{tpu_custom_call.1} parent=1 // pred_check_branch
      %34 = sbr.rel (0) target = $region9
    $region8: #{tpu_custom_call.1} parent=1 // pred_region
      %s35 = sadd.s32 0, 0
      %s36 = smul.u32 8, %s35
      %38 = vsyncadd [#allocation6], 0
      %s39 = smul.addr %s36, 8
      %s40 = scalar_lea.hbm %s1, %s39
      %s41 = sshll.u32 %s40, 4
      %s42 = int_to_ptr.hbm [resolvable:$true] %s41
      %s43 = sshll.u32 [#allocation5], 4
      %s44 = int_to_ptr.vmem [resolvable:$true] %s43
      %49 = dma.hbm_to_vmem [thread:$0]  %s42, 1024, %s44, [#allocation6], 128, 128, 8
    $region9: #{tpu_custom_call.1} parent=1 // pred_fallthru
      _
    // Predicated region
    $region10: #{tpu_custom_call.1} parent=1 // pred_check
      _
    $region11: #{tpu_custom_call.1} parent=1 // pred_check_branch
      %51 = sbr.rel (0) target = $region13
    $region12: #{tpu_custom_call.1} parent=1 // pred_region
      %s52 = sadd.s32 0, 0
      %s53 = smul.u32 8, %s52
      %55 = vsyncadd [#allocation6], 0
      %s56 = smul.addr %s53, 8
      %s57 = scalar_lea.hbm %s2, %s56
      %s58 = sshll.u32 %s57, 4
      %s59 = int_to_ptr.hbm [resolvable:$true] %s58
      %s60 = sshll.u32 [#allocation7], 4
      %s61 = int_to_ptr.vmem [resolvable:$true] %s60
      %66 = dma.hbm_to_vmem [thread:$0]  %s59, 1024, %s61, [#allocation6], 128, 128, 8
    $region13: #{tpu_custom_call.1} parent=1 // pred_fallthru
      _
    // Predicated region
    $region14: #{tpu_custom_call.1} parent=1 // pred_check
      _
    $region15: #{tpu_custom_call.1} parent=1 // pred_check_branch
      %68 = sbr.rel (0) target = $region17
    $region16: #{tpu_custom_call.1} parent=1 // pred_region
      %s69 = sadd.s32 0, 0
      %s70 = smul.u32 8, %s69
      %72 = vsyncadd [#allocation9], 0
      %s73 = smul.addr %s70, 8
      %s74 = scalar_lea.hbm %s3, %s73
      %s75 = sshll.u32 %s74, 4
      %s76 = int_to_ptr.hbm [resolvable:$true] %s75
      %s77 = sshll.u32 [#allocation8], 4
      %s78 = int_to_ptr.vmem [resolvable:$true] %s77
      %83 = dma.hbm_to_vmem [thread:$0]  %s76, 1024, %s78, [#allocation9], 128, 128, 8
    $region17: #{tpu_custom_call.1} parent=1 // pred_fallthru
      _
    // Predicated region
    $region18: #{tpu_custom_call.1} parent=1 // pred_check
      _
    $region19: #{tpu_custom_call.1} parent=1 // pred_check_branch
      %85 = sbr.rel (0) target = $region21
    $region20: #{tpu_custom_call.1} parent=1 // pred_region
      %87 = dma.done [#allocation3], 1024
    $region21: #{tpu_custom_call.1} parent=1 // pred_fallthru
      _
    // Predicated region
    $region22: #{tpu_custom_call.1} parent=1 // pred_check
      _
    $region23: #{tpu_custom_call.1} parent=1 // pred_check_branch
      %89 = sbr.rel (0) target = $region25
    $region24: #{tpu_custom_call.1} parent=1 // pred_region
      %91 = dma.done [#allocation6], 1024
    $region25: #{tpu_custom_call.1} parent=1 // pred_fallthru
      _
    // Predicated region
    $region26: #{tpu_custom_call.1} parent=1 // pred_check
      _
    $region27: #{tpu_custom_call.1} parent=1 // pred_check_branch
      %93 = sbr.rel (0) target = $region29
    $region28: #{tpu_custom_call.1} parent=1 // pred_region
      %95 = dma.done [#allocation6], 1024
    $region29: #{tpu_custom_call.1} parent=1 // pred_fallthru
      _
    // Predicated region
    $region30: #{tpu_custom_call.1} parent=1 // pred_check
      _
    $region31: #{tpu_custom_call.1} parent=1 // pred_check_branch
      %97 = sbr.rel (0) target = $region33
    $region32: #{tpu_custom_call.1} parent=1 // pred_region
      %99 = dma.done [#allocation9], 1024
    $region33: #{tpu_custom_call.1} parent=1 // pred_fallthru
      _
    %s100 = sadd.s32 0, 0
    %s101 = smul.u32 8, %s100
    %s102 = sadd.s32 0, 0
    %s103 = smul.u32 8, %s102
    %s104 = sadd.s32 0, 0
    %s105 = smul.u32 8, %s104
    %s106 = sadd.s32 0, 0
    %s107 = smul.u32 8, %s106
    %p108 = scmp.eq.s32.totalorder 0, 0
    // Predicated region
    $region34: #{tpu_custom_call.1} parent=1 // pred_check
      %p109 = pneg %p108
    $region35: #{tpu_custom_call.1} parent=1 // pred_check_branch
      %111 = sbr.rel (%p109) target = $region37
    $region36: #{tpu_custom_call.1} parent=1 // pred_region
      %vm112 = vcmask 0
      %113 = vst.msk [vmem:[#allocation10] sm:$0x1] %vm112, 0.0
      %114 = vst.msk [vmem:[#allocation11] sm:$0x1] %vm112, 0.0
    $region37: #{tpu_custom_call.1} parent=1 // pred_fallthru
      _
    %v115 = vld [vmem:[#allocation2] sm:$0xff]
    %v116 = vld [vmem:[#allocation2 + $0x8] sm:$0xff]
    %v117 = vld [vmem:[#allocation2 + $0x10] sm:$0xff]
    %v118 = vld [vmem:[#allocation2 + $0x18] sm:$0xff]
    %v119 = vld [vmem:[#allocation2 + $0x20] sm:$0xff]
    %v120 = vld [vmem:[#allocation2 + $0x28] sm:$0xff]
    %v121 = vld [vmem:[#allocation2 + $0x30] sm:$0xff]
    %v122 = vld [vmem:[#allocation2 + $0x38] sm:$0xff]
    %v123 = vld [vmem:[#allocation5] sm:$0xff]
    %v124 = vld [vmem:[#allocation5 + $0x8] sm:$0xff]
    %v125 = vld [vmem:[#allocation5 + $0x10] sm:$0xff]
    %v126 = vld [vmem:[#allocation5 + $0x18] sm:$0xff]
    %v127 = vld [vmem:[#allocation5 + $0x20] sm:$0xff]
    %v128 = vld [vmem:[#allocation5 + $0x28] sm:$0xff]
    %v129 = vld [vmem:[#allocation5 + $0x30] sm:$0xff]
    %v130 = vld [vmem:[#allocation5 + $0x38] sm:$0xff]
    %v131 = vld [vmem:[#allocation7] sm:$0xff]
    %v132 = vld [vmem:[#allocation7 + $0x8] sm:$0xff]
    %v133 = vld [vmem:[#allocation7 + $0x10] sm:$0xff]
    %v134 = vld [vmem:[#allocation7 + $0x18] sm:$0xff]
    %v135 = vld [vmem:[#allocation7 + $0x20] sm:$0xff]
    %v136 = vld [vmem:[#allocation7 + $0x28] sm:$0xff]
    %v137 = vld [vmem:[#allocation7 + $0x30] sm:$0xff]
    %v138 = vld [vmem:[#allocation7 + $0x38] sm:$0xff]
    %v139 = vld [vmem:[#allocation8] sm:$0xff]
    %v140 = vld [vmem:[#allocation8 + $0x8] sm:$0xff]
    %v141 = vld [vmem:[#allocation8 + $0x10] sm:$0xff]
    %v142 = vld [vmem:[#allocation8 + $0x18] sm:$0xff]
    %v143 = vld [vmem:[#allocation8 + $0x20] sm:$0xff]
    %v144 = vld [vmem:[#allocation8 + $0x28] sm:$0xff]
    %v145 = vld [vmem:[#allocation8 + $0x30] sm:$0xff]
    %v146 = vld [vmem:[#allocation8 + $0x38] sm:$0xff]
    %s147 = sadd.s32 0, 0
    %s148 = smul.u32 %s147, 64
    %v149 = vlaneseq
    %v150 = vshrl.u32 %v149, 7
    %v151 = vadd.s32 %v150, 8
    %v152 = vadd.s32 %v150, 16
    %v153 = vadd.s32 %v150, 24
    %v154 = vadd.s32 %v150, 32
    %v155 = vadd.s32 %v150, 40
    %v156 = vadd.s32 %v150, 48
    %v157 = vadd.s32 %v150, 56
    %v158 = vstv %s148
    %v159 = vadd.s32 %v158, %v150
    %v160 = vadd.s32 %v158, %v151
    %v161 = vadd.s32 %v158, %v152
    %v162 = vadd.s32 %v158, %v153
    %v163 = vadd.s32 %v158, %v154
    %v164 = vadd.s32 %v158, %v155
    %v165 = vadd.s32 %v158, %v156
    %v166 = vadd.s32 %v158, %v157
    %vm167 = vcmp.lt.s32.totalorder %v159, 64
    %vm168 = vcmp.lt.s32.totalorder %v160, 64
    %vm169 = vcmp.lt.s32.totalorder %v161, 64
    %vm170 = vcmp.lt.s32.totalorder %v162, 64
    %vm171 = vcmp.lt.s32.totalorder %v163, 64
    %vm172 = vcmp.lt.s32.totalorder %v164, 64
    %vm173 = vcmp.lt.s32.totalorder %v165, 64
    %vm174 = vcmp.lt.s32.totalorder %v166, 64
    %v175 = vsel %vm167, 1, 0
    %v176 = vsel %vm168, 1, 0
    %v177 = vsel %vm169, 1, 0
    %v178 = vsel %vm170, 1, 0
    %v179 = vsel %vm171, 1, 0
    %v180 = vsel %vm172, 1, 0
    %v181 = vsel %vm173, 1, 0
    %v182 = vsel %vm174, 1, 0
    %v183 = vcvt.s32.f32 %v175
    %v184 = vcvt.s32.f32 %v176
    %v185 = vcvt.s32.f32 %v177
    %v186 = vcvt.s32.f32 %v178
    %v187 = vcvt.s32.f32 %v179
    %v188 = vcvt.s32.f32 %v180
    %v189 = vcvt.s32.f32 %v181
    %v190 = vcvt.s32.f32 %v182
    %v191 = vsub.f32 %v115, %v123
    %v192 = vsub.f32 %v116, %v124
    %v193 = vsub.f32 %v117, %v125
    %v194 = vsub.f32 %v118, %v126
    %v195 = vsub.f32 %v119, %v127
    %v196 = vsub.f32 %v120, %v128
    %v197 = vsub.f32 %v121, %v129
    %v198 = vsub.f32 %v122, %v130
    %v199 = vmul.f32 %v191, %v191
    %v200 = vmul.f32 %v192, %v192
    %v201 = vmul.f32 %v193, %v193
    %v202 = vmul.f32 %v194, %v194
    %v203 = vmul.f32 %v195, %v195
    %v204 = vmul.f32 %v196, %v196
    %v205 = vmul.f32 %v197, %v197
    %v206 = vmul.f32 %v198, %v198
    %207 = vadd.xlane.f32.xlu0 %v199
    %v208 = vpop.xlane.xlu0 %207
    %209 = vadd.xlane.f32.xlu0 %v200
    %v210 = vpop.xlane.xlu0 %209
    %211 = vadd.xlane.f32.xlu0 %v201
    %v212 = vpop.xlane.xlu0 %211
    %213 = vadd.xlane.f32.xlu0 %v202
    %v214 = vpop.xlane.xlu0 %213
    %215 = vadd.xlane.f32.xlu0 %v203
    %v216 = vpop.xlane.xlu0 %215
    %217 = vadd.xlane.f32.xlu0 %v204
    %v218 = vpop.xlane.xlu0 %217
    %219 = vadd.xlane.f32.xlu0 %v205
    %v220 = vpop.xlane.xlu0 %219
    %221 = vadd.xlane.f32.xlu0 %v206
    %v222 = vpop.xlane.xlu0 %221
    %v223 = vsub.f32 %v115, %v131
    %v224 = vsub.f32 %v116, %v132
    %v225 = vsub.f32 %v117, %v133
    %v226 = vsub.f32 %v118, %v134
    %v227 = vsub.f32 %v119, %v135
    %v228 = vsub.f32 %v120, %v136
    %v229 = vsub.f32 %v121, %v137
    %v230 = vsub.f32 %v122, %v138
    %v231 = vmul.f32 %v223, %v223
    %v232 = vmul.f32 %v224, %v224
    %v233 = vmul.f32 %v225, %v225
    %v234 = vmul.f32 %v226, %v226
    %v235 = vmul.f32 %v227, %v227
    %v236 = vmul.f32 %v228, %v228
    %v237 = vmul.f32 %v229, %v229
    %v238 = vmul.f32 %v230, %v230
    %239 = vadd.xlane.f32.xlu0 %v231
    %v240 = vpop.xlane.xlu0 %239
    %241 = vadd.xlane.f32.xlu0 %v232
    %v242 = vpop.xlane.xlu0 %241
    %243 = vadd.xlane.f32.xlu0 %v233
    %v244 = vpop.xlane.xlu0 %243
    %245 = vadd.xlane.f32.xlu0 %v234
    %v246 = vpop.xlane.xlu0 %245
    %247 = vadd.xlane.f32.xlu0 %v235
    %v248 = vpop.xlane.xlu0 %247
    %249 = vadd.xlane.f32.xlu0 %v236
    %v250 = vpop.xlane.xlu0 %249
    %251 = vadd.xlane.f32.xlu0 %v237
    %v252 = vpop.xlane.xlu0 %251
    %253 = vadd.xlane.f32.xlu0 %v238
    %v254 = vpop.xlane.xlu0 %253
    %v255 = vadd.f32 %v208, 1e-12
    %v256 = vadd.f32 %v210, 1e-12
    %v257 = vadd.f32 %v212, 1e-12
    %v258 = vadd.f32 %v214, 1e-12
    %v259 = vadd.f32 %v216, 1e-12
    %v260 = vadd.f32 %v218, 1e-12
    %v261 = vadd.f32 %v220, 1e-12
    %v262 = vadd.f32 %v222, 1e-12
    %v263 = vrsqrt.pop %v255
    %v264 = vmul.f32 %v263, %v255
    %v265 = vmul.f32 %v264, %v263
    %v266 = vmul.f32 0.5, %v265
    %v267 = vsub.f32 1.5, %v266
    %v268 = vmul.f32 %v263, %v267
    %v269 = vmul.f32 %v255, %v268
    %vm270 = vcmp.eq.f32.partialorder %v255, inf
    %v271 = vsel %vm270, %v255, %v269
    %vm272 = vcmp.eq.f32.partialorder %v255, 0.0
    %v273 = vand.u32 %v255, 2147483648
    %v274 = vsel %vm272, %v273, %v271
    %v275 = vrsqrt.pop %v256
    %v276 = vmul.f32 %v275, %v256
    %v277 = vmul.f32 %v276, %v275
    %v278 = vmul.f32 0.5, %v277
    %v279 = vsub.f32 1.5, %v278
    %v280 = vmul.f32 %v275, %v279
    %v281 = vmul.f32 %v256, %v280
    %vm282 = vcmp.eq.f32.partialorder %v256, inf
    %v283 = vsel %vm282, %v256, %v281
    %vm284 = vcmp.eq.f32.partialorder %v256, 0.0
    %v285 = vand.u32 %v256, 2147483648
    %v286 = vsel %vm284, %v285, %v283
    %v287 = vrsqrt.pop %v257
    %v288 = vmul.f32 %v287, %v257
    %v289 = vmul.f32 %v288, %v287
    %v290 = vmul.f32 0.5, %v289
    %v291 = vsub.f32 1.5, %v290
    %v292 = vmul.f32 %v287, %v291
    %v293 = vmul.f32 %v257, %v292
    %vm294 = vcmp.eq.f32.partialorder %v257, inf
    %v295 = vsel %vm294, %v257, %v293
    %vm296 = vcmp.eq.f32.partialorder %v257, 0.0
    %v297 = vand.u32 %v257, 2147483648
    %v298 = vsel %vm296, %v297, %v295
    %v299 = vrsqrt.pop %v258
    %v300 = vmul.f32 %v299, %v258
    %v301 = vmul.f32 %v300, %v299
    %v302 = vmul.f32 0.5, %v301
    %v303 = vsub.f32 1.5, %v302
    %v304 = vmul.f32 %v299, %v303
    %v305 = vmul.f32 %v258, %v304
    %vm306 = vcmp.eq.f32.partialorder %v258, inf
    %v307 = vsel %vm306, %v258, %v305
    %vm308 = vcmp.eq.f32.partialorder %v258, 0.0
    %v309 = vand.u32 %v258, 2147483648
    %v310 = vsel %vm308, %v309, %v307
    %v311 = vrsqrt.pop %v259
    %v312 = vmul.f32 %v311, %v259
    %v313 = vmul.f32 %v312, %v311
    %v314 = vmul.f32 0.5, %v313
    %v315 = vsub.f32 1.5, %v314
    %v316 = vmul.f32 %v311, %v315
    %v317 = vmul.f32 %v259, %v316
    %vm318 = vcmp.eq.f32.partialorder %v259, inf
    %v319 = vsel %vm318, %v259, %v317
    %vm320 = vcmp.eq.f32.partialorder %v259, 0.0
    %v321 = vand.u32 %v259, 2147483648
    %v322 = vsel %vm320, %v321, %v319
    %v323 = vrsqrt.pop %v260
    %v324 = vmul.f32 %v323, %v260
    %v325 = vmul.f32 %v324, %v323
    %v326 = vmul.f32 0.5, %v325
    %v327 = vsub.f32 1.5, %v326
    %v328 = vmul.f32 %v323, %v327
    %v329 = vmul.f32 %v260, %v328
    %vm330 = vcmp.eq.f32.partialorder %v260, inf
    %v331 = vsel %vm330, %v260, %v329
    %vm332 = vcmp.eq.f32.partialorder %v260, 0.0
    %v333 = vand.u32 %v260, 2147483648
    %v334 = vsel %vm332, %v333, %v331
    %v335 = vrsqrt.pop %v261
    %v336 = vmul.f32 %v335, %v261
    %v337 = vmul.f32 %v336, %v335
    %v338 = vmul.f32 0.5, %v337
    %v339 = vsub.f32 1.5, %v338
    %v340 = vmul.f32 %v335, %v339
    %v341 = vmul.f32 %v261, %v340
    %vm342 = vcmp.eq.f32.partialorder %v261, inf
    %v343 = vsel %vm342, %v261, %v341
    %vm344 = vcmp.eq.f32.partialorder %v261, 0.0
    %v345 = vand.u32 %v261, 2147483648
    %v346 = vsel %vm344, %v345, %v343
    %v347 = vrsqrt.pop %v262
    %v348 = vmul.f32 %v347, %v262
    %v349 = vmul.f32 %v348, %v347
    %v350 = vmul.f32 0.5, %v349
    %v351 = vsub.f32 1.5, %v350
    %v352 = vmul.f32 %v347, %v351
    %v353 = vmul.f32 %v262, %v352
    %vm354 = vcmp.eq.f32.partialorder %v262, inf
    %v355 = vsel %vm354, %v262, %v353
    %vm356 = vcmp.eq.f32.partialorder %v262, 0.0
    %v357 = vand.u32 %v262, 2147483648
    %v358 = vsel %vm356, %v357, %v355
    %v359 = vadd.f32 %v240, 1e-12
    %v360 = vadd.f32 %v242, 1e-12
    %v361 = vadd.f32 %v244, 1e-12
    %v362 = vadd.f32 %v246, 1e-12
    %v363 = vadd.f32 %v248, 1e-12
    %v364 = vadd.f32 %v250, 1e-12
    %v365 = vadd.f32 %v252, 1e-12
    %v366 = vadd.f32 %v254, 1e-12
    %v367 = vrsqrt.pop %v359
    %v368 = vmul.f32 %v367, %v359
    %v369 = vmul.f32 %v368, %v367
    %v370 = vmul.f32 0.5, %v369
    %v371 = vsub.f32 1.5, %v370
    %v372 = vmul.f32 %v367, %v371
    %v373 = vmul.f32 %v359, %v372
    %vm374 = vcmp.eq.f32.partialorder %v359, inf
    %v375 = vsel %vm374, %v359, %v373
    %vm376 = vcmp.eq.f32.partialorder %v359, 0.0
    %v377 = vand.u32 %v359, 2147483648
    %v378 = vsel %vm376, %v377, %v375
    %v379 = vrsqrt.pop %v360
    %v380 = vmul.f32 %v379, %v360
    %v381 = vmul.f32 %v380, %v379
    %v382 = vmul.f32 0.5, %v381
    %v383 = vsub.f32 1.5, %v382
    %v384 = vmul.f32 %v379, %v383
    %v385 = vmul.f32 %v360, %v384
    %vm386 = vcmp.eq.f32.partialorder %v360, inf
    %v387 = vsel %vm386, %v360, %v385
    %vm388 = vcmp.eq.f32.partialorder %v360, 0.0
    %v389 = vand.u32 %v360, 2147483648
    %v390 = vsel %vm388, %v389, %v387
    %v391 = vrsqrt.pop %v361
    %v392 = vmul.f32 %v391, %v361
    %v393 = vmul.f32 %v392, %v391
    %v394 = vmul.f32 0.5, %v393
    %v395 = vsub.f32 1.5, %v394
    %v396 = vmul.f32 %v391, %v395
    %v397 = vmul.f32 %v361, %v396
    %vm398 = vcmp.eq.f32.partialorder %v361, inf
    %v399 = vsel %vm398, %v361, %v397
    %vm400 = vcmp.eq.f32.partialorder %v361, 0.0
    %v401 = vand.u32 %v361, 2147483648
    %v402 = vsel %vm400, %v401, %v399
    %v403 = vrsqrt.pop %v362
    %v404 = vmul.f32 %v403, %v362
    %v405 = vmul.f32 %v404, %v403
    %v406 = vmul.f32 0.5, %v405
    %v407 = vsub.f32 1.5, %v406
    %v408 = vmul.f32 %v403, %v407
    %v409 = vmul.f32 %v362, %v408
    %vm410 = vcmp.eq.f32.partialorder %v362, inf
    %v411 = vsel %vm410, %v362, %v409
    %vm412 = vcmp.eq.f32.partialorder %v362, 0.0
    %v413 = vand.u32 %v362, 2147483648
    %v414 = vsel %vm412, %v413, %v411
    %v415 = vrsqrt.pop %v363
    %v416 = vmul.f32 %v415, %v363
    %v417 = vmul.f32 %v416, %v415
    %v418 = vmul.f32 0.5, %v417
    %v419 = vsub.f32 1.5, %v418
    %v420 = vmul.f32 %v415, %v419
    %v421 = vmul.f32 %v363, %v420
    %vm422 = vcmp.eq.f32.partialorder %v363, inf
    %v423 = vsel %vm422, %v363, %v421
    %vm424 = vcmp.eq.f32.partialorder %v363, 0.0
    %v425 = vand.u32 %v363, 2147483648
    %v426 = vsel %vm424, %v425, %v423
    %v427 = vrsqrt.pop %v364
    %v428 = vmul.f32 %v427, %v364
    %v429 = vmul.f32 %v428, %v427
    %v430 = vmul.f32 0.5, %v429
    %v431 = vsub.f32 1.5, %v430
    %v432 = vmul.f32 %v427, %v431
    %v433 = vmul.f32 %v364, %v432
    %vm434 = vcmp.eq.f32.partialorder %v364, inf
    %v435 = vsel %vm434, %v364, %v433
    %vm436 = vcmp.eq.f32.partialorder %v364, 0.0
    %v437 = vand.u32 %v364, 2147483648
    %v438 = vsel %vm436, %v437, %v435
    %v439 = vrsqrt.pop %v365
    %v440 = vmul.f32 %v439, %v365
    %v441 = vmul.f32 %v440, %v439
    %v442 = vmul.f32 0.5, %v441
    %v443 = vsub.f32 1.5, %v442
    %v444 = vmul.f32 %v439, %v443
    %v445 = vmul.f32 %v365, %v444
    %vm446 = vcmp.eq.f32.partialorder %v365, inf
    %v447 = vsel %vm446, %v365, %v445
    %vm448 = vcmp.eq.f32.partialorder %v365, 0.0
    %v449 = vand.u32 %v365, 2147483648
    %v450 = vsel %vm448, %v449, %v447
    %v451 = vrsqrt.pop %v366
    %v452 = vmul.f32 %v451, %v366
    %v453 = vmul.f32 %v452, %v451
    %v454 = vmul.f32 0.5, %v453
    %v455 = vsub.f32 1.5, %v454
    %v456 = vmul.f32 %v451, %v455
    %v457 = vmul.f32 %v366, %v456
    %vm458 = vcmp.eq.f32.partialorder %v366, inf
    %v459 = vsel %vm458, %v366, %v457
    %vm460 = vcmp.eq.f32.partialorder %v366, 0.0
    %v461 = vand.u32 %v366, 2147483648
    %v462 = vsel %vm460, %v461, %v459
    %v463 = vsub.f32 %v274, %v378
    %v464 = vsub.f32 %v286, %v390
    %v465 = vsub.f32 %v298, %v402
    %v466 = vsub.f32 %v310, %v414
    %v467 = vsub.f32 %v322, %v426
    %v468 = vsub.f32 %v334, %v438
    %v469 = vsub.f32 %v346, %v450
    %v470 = vsub.f32 %v358, %v462
    %v471 = vadd.f32 %v463, 1.0
    %v472 = vadd.f32 %v464, 1.0
    %v473 = vadd.f32 %v465, 1.0
    %v474 = vadd.f32 %v466, 1.0
    %v475 = vadd.f32 %v467, 1.0
    %v476 = vadd.f32 %v468, 1.0
    %v477 = vadd.f32 %v469, 1.0
    %v478 = vadd.f32 %v470, 1.0
    %v479 = vmax.f32 %v471, 0.0
    %v480 = vmax.f32 %v472, 0.0
    %v481 = vmax.f32 %v473, 0.0
    %v482 = vmax.f32 %v474, 0.0
    %v483 = vmax.f32 %v475, 0.0
    %v484 = vmax.f32 %v476, 0.0
    %v485 = vmax.f32 %v477, 0.0
    %v486 = vmax.f32 %v478, 0.0
    %vm487 = vcmp.gt.f32.partialorder %v240, %v208
    %vm488 = vcmp.gt.f32.partialorder %v242, %v210
    %vm489 = vcmp.gt.f32.partialorder %v244, %v212
    %vm490 = vcmp.gt.f32.partialorder %v246, %v214
    %vm491 = vcmp.gt.f32.partialorder %v248, %v216
    %vm492 = vcmp.gt.f32.partialorder %v250, %v218
    %vm493 = vcmp.gt.f32.partialorder %v252, %v220
    %vm494 = vcmp.gt.f32.partialorder %v254, %v222
    %v495 = vsel %vm487, 1, 0
    %v496 = vsel %vm488, 1, 0
    %v497 = vsel %vm489, 1, 0
    %v498 = vsel %vm490, 1, 0
    %v499 = vsel %vm491, 1, 0
    %v500 = vsel %vm492, 1, 0
    %v501 = vsel %vm493, 1, 0
    %v502 = vsel %vm494, 1, 0
    %v503 = vcvt.s32.f32 %v495
    %v504 = vcvt.s32.f32 %v496
    %v505 = vcvt.s32.f32 %v497
    %v506 = vcvt.s32.f32 %v498
    %v507 = vcvt.s32.f32 %v499
    %v508 = vcvt.s32.f32 %v500
    %v509 = vcvt.s32.f32 %v501
    %v510 = vcvt.s32.f32 %v502
    %v511 = vmul.f32 %v115, 0.5
    %v512 = vmul.f32 %v116, 0.5
    %v513 = vmul.f32 %v117, 0.5
    %v514 = vmul.f32 %v118, 0.5
    %v515 = vmul.f32 %v119, 0.5
    %v516 = vmul.f32 %v120, 0.5
    %v517 = vmul.f32 %v121, 0.5
    %v518 = vmul.f32 %v122, 0.5
    %519 = vmax.xlane.f32.xlu0 %v511
    %v520 = vpop.xlane.xlu0 %519
    %521 = vmax.xlane.f32.xlu0 %v512
    %v522 = vpop.xlane.xlu0 %521
    %523 = vmax.xlane.f32.xlu0 %v513
    %v524 = vpop.xlane.xlu0 %523
    %525 = vmax.xlane.f32.xlu0 %v514
    %v526 = vpop.xlane.xlu0 %525
    %527 = vmax.xlane.f32.xlu0 %v515
    %v528 = vpop.xlane.xlu0 %527
    %529 = vmax.xlane.f32.xlu0 %v516
    %v530 = vpop.xlane.xlu0 %529
    %531 = vmax.xlane.f32.xlu0 %v517
    %v532 = vpop.xlane.xlu0 %531
    %533 = vmax.xlane.f32.xlu0 %v518
    %v534 = vpop.xlane.xlu0 %533
    %v535 = vsub.f32 %v511, %v520
    %v536 = vsub.f32 %v512, %v522
    %v537 = vsub.f32 %v513, %v524
    %v538 = vsub.f32 %v514, %v526
    %v539 = vsub.f32 %v515, %v528
    %v540 = vsub.f32 %v516, %v530
    %v541 = vsub.f32 %v517, %v532
    %v542 = vsub.f32 %v518, %v534
    %v543 = vmul.f32 %v535, 1.442695
    %v544 = vpow.pop %v543
    %v545 = vmul.f32 %v536, 1.442695
    %v546 = vpow.pop %v545
    %v547 = vmul.f32 %v537, 1.442695
    %v548 = vpow.pop %v547
    %v549 = vmul.f32 %v538, 1.442695
    %v550 = vpow.pop %v549
    %v551 = vmul.f32 %v539, 1.442695
    %v552 = vpow.pop %v551
    %v553 = vmul.f32 %v540, 1.442695
    %v554 = vpow.pop %v553
    %v555 = vmul.f32 %v541, 1.442695
    %v556 = vpow.pop %v555
    %v557 = vmul.f32 %v542, 1.442695
    %v558 = vpow.pop %v557
    %559 = vadd.xlane.f32.xlu0 %v544
    %v560 = vpop.xlane.xlu0 %559
    %561 = vadd.xlane.f32.xlu0 %v546
    %v562 = vpop.xlane.xlu0 %561
    %563 = vadd.xlane.f32.xlu0 %v548
    %v564 = vpop.xlane.xlu0 %563
    %565 = vadd.xlane.f32.xlu0 %v550
    %v566 = vpop.xlane.xlu0 %565
    %567 = vadd.xlane.f32.xlu0 %v552
    %v568 = vpop.xlane.xlu0 %567
    %569 = vadd.xlane.f32.xlu0 %v554
    %v570 = vpop.xlane.xlu0 %569
    %571 = vadd.xlane.f32.xlu0 %v556
    %v572 = vpop.xlane.xlu0 %571
    %573 = vadd.xlane.f32.xlu0 %v558
    %v574 = vpop.xlane.xlu0 %573
    %v575 = vrcp.pop %v560
    %v576 = vrcp.pop %v562
    %v577 = vrcp.pop %v564
    %v578 = vrcp.pop %v566
    %v579 = vrcp.pop %v568
    %v580 = vrcp.pop %v570
    %v581 = vrcp.pop %v572
    %v582 = vrcp.pop %v574
    %v583 = vmul.f32 %v560, %v575
    %v584 = vmul.f32 %v562, %v576
    %v585 = vmul.f32 %v564, %v577
    %v586 = vmul.f32 %v566, %v578
    %v587 = vmul.f32 %v568, %v579
    %v588 = vmul.f32 %v570, %v580
    %v589 = vmul.f32 %v572, %v581
    %v590 = vmul.f32 %v574, %v582
    %v591 = vsub.f32 2.0, %v583
    %v592 = vsub.f32 2.0, %v584
    %v593 = vsub.f32 2.0, %v585
    %v594 = vsub.f32 2.0, %v586
    %v595 = vsub.f32 2.0, %v587
    %v596 = vsub.f32 2.0, %v588
    %v597 = vsub.f32 2.0, %v589
    %v598 = vsub.f32 2.0, %v590
    %v599 = vmul.f32 %v575, %v591
    %v600 = vmul.f32 %v576, %v592
    %v601 = vmul.f32 %v577, %v593
    %v602 = vmul.f32 %v578, %v594
    %v603 = vmul.f32 %v579, %v595
    %v604 = vmul.f32 %v580, %v596
    %v605 = vmul.f32 %v581, %v597
    %v606 = vmul.f32 %v582, %v598
    %v607 = vmul.f32 %v544, %v599
    %v608 = vmul.f32 %v546, %v600
    %v609 = vmul.f32 %v548, %v601
    %v610 = vmul.f32 %v550, %v602
    %v611 = vmul.f32 %v552, %v603
    %v612 = vmul.f32 %v554, %v604
    %v613 = vmul.f32 %v556, %v605
    %v614 = vmul.f32 %v558, %v606
    %v615 = vmul.f32 %v139, 0.5
    %v616 = vmul.f32 %v140, 0.5
    %v617 = vmul.f32 %v141, 0.5
    %v618 = vmul.f32 %v142, 0.5
    %v619 = vmul.f32 %v143, 0.5
    %v620 = vmul.f32 %v144, 0.5
    %v621 = vmul.f32 %v145, 0.5
    %v622 = vmul.f32 %v146, 0.5
    %623 = vmax.xlane.f32.xlu0 %v615
    %v624 = vpop.xlane.xlu0 %623
    %625 = vmax.xlane.f32.xlu0 %v616
    %v626 = vpop.xlane.xlu0 %625
    %627 = vmax.xlane.f32.xlu0 %v617
    %v628 = vpop.xlane.xlu0 %627
    %629 = vmax.xlane.f32.xlu0 %v618
    %v630 = vpop.xlane.xlu0 %629
    %631 = vmax.xlane.f32.xlu0 %v619
    %v632 = vpop.xlane.xlu0 %631
    %633 = vmax.xlane.f32.xlu0 %v620
    %v634 = vpop.xlane.xlu0 %633
    %635 = vmax.xlane.f32.xlu0 %v621
    %v636 = vpop.xlane.xlu0 %635
    %637 = vmax.xlane.f32.xlu0 %v622
    %v638 = vpop.xlane.xlu0 %637
    %v639 = vsub.f32 %v615, %v624
    %v640 = vsub.f32 %v616, %v626
    %v641 = vsub.f32 %v617, %v628
    %v642 = vsub.f32 %v618, %v630
    %v643 = vsub.f32 %v619, %v632
    %v644 = vsub.f32 %v620, %v634
    %v645 = vsub.f32 %v621, %v636
    %v646 = vsub.f32 %v622, %v638
    %v647 = vmul.f32 %v639, 1.442695
    %v648 = vpow.pop %v647
    %v649 = vmul.f32 %v640, 1.442695
    %v650 = vpow.pop %v649
    %v651 = vmul.f32 %v641, 1.442695
    %v652 = vpow.pop %v651
    %v653 = vmul.f32 %v642, 1.442695
    %v654 = vpow.pop %v653
    %v655 = vmul.f32 %v643, 1.442695
    %v656 = vpow.pop %v655
    %v657 = vmul.f32 %v644, 1.442695
    %v658 = vpow.pop %v657
    %v659 = vmul.f32 %v645, 1.442695
    %v660 = vpow.pop %v659
    %v661 = vmul.f32 %v646, 1.442695
    %v662 = vpow.pop %v661
    %663 = vadd.xlane.f32.xlu0 %v648
    %v664 = vpop.xlane.xlu0 %663
    %665 = vadd.xlane.f32.xlu0 %v650
    %v666 = vpop.xlane.xlu0 %665
    %667 = vadd.xlane.f32.xlu0 %v652
    %v668 = vpop.xlane.xlu0 %667
    %669 = vadd.xlane.f32.xlu0 %v654
    %v670 = vpop.xlane.xlu0 %669
    %671 = vadd.xlane.f32.xlu0 %v656
    %v672 = vpop.xlane.xlu0 %671
    %673 = vadd.xlane.f32.xlu0 %v658
    %v674 = vpop.xlane.xlu0 %673
    %675 = vadd.xlane.f32.xlu0 %v660
    %v676 = vpop.xlane.xlu0 %675
    %677 = vadd.xlane.f32.xlu0 %v662
    %v678 = vpop.xlane.xlu0 %677
    %v679 = vrcp.pop %v664
    %v680 = vrcp.pop %v666
    %v681 = vrcp.pop %v668
    %v682 = vrcp.pop %v670
    %v683 = vrcp.pop %v672
    %v684 = vrcp.pop %v674
    %v685 = vrcp.pop %v676
    %v686 = vrcp.pop %v678
    %v687 = vmul.f32 %v664, %v679
    %v688 = vmul.f32 %v666, %v680
    %v689 = vmul.f32 %v668, %v681
    %v690 = vmul.f32 %v670, %v682
    %v691 = vmul.f32 %v672, %v683
    %v692 = vmul.f32 %v674, %v684
    %v693 = vmul.f32 %v676, %v685
    %v694 = vmul.f32 %v678, %v686
    %v695 = vsub.f32 2.0, %v687
    %v696 = vsub.f32 2.0, %v688
    %v697 = vsub.f32 2.0, %v689
    %v698 = vsub.f32 2.0, %v690
    %v699 = vsub.f32 2.0, %v691
    %v700 = vsub.f32 2.0, %v692
    %v701 = vsub.f32 2.0, %v693
    %v702 = vsub.f32 2.0, %v694
    %v703 = vmul.f32 %v679, %v695
    %v704 = vmul.f32 %v680, %v696
    %v705 = vmul.f32 %v681, %v697
    %v706 = vmul.f32 %v682, %v698
    %v707 = vmul.f32 %v683, %v699
    %v708 = vmul.f32 %v684, %v700
    %v709 = vmul.f32 %v685, %v701
    %v710 = vmul.f32 %v686, %v702
    %v711 = vmul.f32 %v648, %v703
    %v712 = vmul.f32 %v650, %v704
    %v713 = vmul.f32 %v652, %v705
    %v714 = vmul.f32 %v654, %v706
    %v715 = vmul.f32 %v656, %v707
    %v716 = vmul.f32 %v658, %v708
    %v717 = vmul.f32 %v660, %v709
    %v718 = vmul.f32 %v662, %v710
    %v719 = vadd.f32 %v607, 7.8125e-08
    %v720 = vadd.f32 %v608, 7.8125e-08
    %v721 = vadd.f32 %v609, 7.8125e-08
    %v722 = vadd.f32 %v610, 7.8125e-08
    %v723 = vadd.f32 %v611, 7.8125e-08
    %v724 = vadd.f32 %v612, 7.8125e-08
    %v725 = vadd.f32 %v613, 7.8125e-08
    %v726 = vadd.f32 %v614, 7.8125e-08
    %727 = vadd.xlane.f32.xlu0 %v719
    %v728 = vpop.xlane.xlu0 %727
    %729 = vadd.xlane.f32.xlu0 %v720
    %v730 = vpop.xlane.xlu0 %729
    %731 = vadd.xlane.f32.xlu0 %v721
    %v732 = vpop.xlane.xlu0 %731
    %733 = vadd.xlane.f32.xlu0 %v722
    %v734 = vpop.xlane.xlu0 %733
    %735 = vadd.xlane.f32.xlu0 %v723
    %v736 = vpop.xlane.xlu0 %735
    %737 = vadd.xlane.f32.xlu0 %v724
    %v738 = vpop.xlane.xlu0 %737
    %739 = vadd.xlane.f32.xlu0 %v725
    %v740 = vpop.xlane.xlu0 %739
    %741 = vadd.xlane.f32.xlu0 %v726
    %v742 = vpop.xlane.xlu0 %741
    %v743 = vrcp.pop %v728
    %v744 = vrcp.pop %v730
    %v745 = vrcp.pop %v732
    %v746 = vrcp.pop %v734
    %v747 = vrcp.pop %v736
    %v748 = vrcp.pop %v738
    %v749 = vrcp.pop %v740
    %v750 = vrcp.pop %v742
    %v751 = vmul.f32 %v728, %v743
    %v752 = vmul.f32 %v730, %v744
    %v753 = vmul.f32 %v732, %v745
    %v754 = vmul.f32 %v734, %v746
    %v755 = vmul.f32 %v736, %v747
    %v756 = vmul.f32 %v738, %v748
    %v757 = vmul.f32 %v740, %v749
    %v758 = vmul.f32 %v742, %v750
    %v759 = vsub.f32 2.0, %v751
    %v760 = vsub.f32 2.0, %v752
    %v761 = vsub.f32 2.0, %v753
    %v762 = vsub.f32 2.0, %v754
    %v763 = vsub.f32 2.0, %v755
    %v764 = vsub.f32 2.0, %v756
    %v765 = vsub.f32 2.0, %v757
    %v766 = vsub.f32 2.0, %v758
    %v767 = vmul.f32 %v743, %v759
    %v768 = vmul.f32 %v744, %v760
    %v769 = vmul.f32 %v745, %v761
    %v770 = vmul.f32 %v746, %v762
    %v771 = vmul.f32 %v747, %v763
    %v772 = vmul.f32 %v748, %v764
    %v773 = vmul.f32 %v749, %v765
    %v774 = vmul.f32 %v750, %v766
    %v775 = vmul.f32 %v719, %v767
    %v776 = vmul.f32 %v720, %v768
    %v777 = vmul.f32 %v721, %v769
    %v778 = vmul.f32 %v722, %v770
    %v779 = vmul.f32 %v723, %v771
    %v780 = vmul.f32 %v724, %v772
    %v781 = vmul.f32 %v725, %v773
    %v782 = vmul.f32 %v726, %v774
    %v783 = vlog2.pop %v775
    %v784 = vmul.f32 %v783, 0.6931472
    %v785 = vlog2.pop %v776
    %v786 = vmul.f32 %v785, 0.6931472
    %v787 = vlog2.pop %v777
    %v788 = vmul.f32 %v787, 0.6931472
    %v789 = vlog2.pop %v778
    %v790 = vmul.f32 %v789, 0.6931472
    %v791 = vlog2.pop %v779
    %v792 = vmul.f32 %v791, 0.6931472
    %v793 = vlog2.pop %v780
    %v794 = vmul.f32 %v793, 0.6931472
    %v795 = vlog2.pop %v781
    %v796 = vmul.f32 %v795, 0.6931472
    %v797 = vlog2.pop %v782
    %v798 = vmul.f32 %v797, 0.6931472
    %v799 = vmul.f32 %v711, %v784
    %v800 = vmul.f32 %v712, %v786
    %v801 = vmul.f32 %v713, %v788
    %v802 = vmul.f32 %v714, %v790
    %v803 = vmul.f32 %v715, %v792
    %v804 = vmul.f32 %v716, %v794
    %v805 = vmul.f32 %v717, %v796
    %v806 = vmul.f32 %v718, %v798
    %807 = vadd.xlane.f32.xlu0 %v799
    %v808 = vpop.xlane.xlu0 %807
    %809 = vadd.xlane.f32.xlu0 %v800
    %v810 = vpop.xlane.xlu0 %809
    %811 = vadd.xlane.f32.xlu0 %v801
    %v812 = vpop.xlane.xlu0 %811
    %813 = vadd.xlane.f32.xlu0 %v802
    %v814 = vpop.xlane.xlu0 %813
    %815 = vadd.xlane.f32.xlu0 %v803
    %v816 = vpop.xlane.xlu0 %815
    %817 = vadd.xlane.f32.xlu0 %v804
    %v818 = vpop.xlane.xlu0 %817
    %819 = vadd.xlane.f32.xlu0 %v805
    %v820 = vpop.xlane.xlu0 %819
    %821 = vadd.xlane.f32.xlu0 %v806
    %v822 = vpop.xlane.xlu0 %821
    %v823 = vsub.f32 0.0, %v808
    %v824 = vsub.f32 0.0, %v810
    %v825 = vsub.f32 0.0, %v812
    %v826 = vsub.f32 0.0, %v814
    %v827 = vsub.f32 0.0, %v816
    %v828 = vsub.f32 0.0, %v818
    %v829 = vsub.f32 0.0, %v820
    %v830 = vsub.f32 0.0, %v822
    %v831 = vld [vmem:[#allocation10] sm:$0x1]
    %v832 = vadd.f32 %v479, %v823
    %v833 = vadd.f32 %v480, %v824
    %v834 = vadd.f32 %v481, %v825
    %v835 = vadd.f32 %v482, %v826
    %v836 = vadd.f32 %v483, %v827
    %v837 = vadd.f32 %v484, %v828
    %v838 = vadd.f32 %v485, %v829
    %v839 = vadd.f32 %v486, %v830
    %v840 = vmul.f32 %v183, %v832
    %v841 = vmul.f32 %v184, %v833
    %v842 = vmul.f32 %v185, %v834
    %v843 = vmul.f32 %v186, %v835
    %v844 = vmul.f32 %v187, %v836
    %v845 = vmul.f32 %v188, %v837
    %v846 = vmul.f32 %v189, %v838
    %v847 = vmul.f32 %v190, %v839
    %vm848 = vcmask 7168
    %v849 = vsel %vm848, %v840, 0.0
    %v850 = vsel %vm848, %v841, 0.0
    %v851 = vadd.f32 %v849, %v850
    %v852 = vsel %vm848, %v842, 0.0
    %v853 = vadd.f32 %v851, %v852
    %v854 = vsel %vm848, %v843, 0.0
    %v855 = vadd.f32 %v853, %v854
    %v856 = vsel %vm848, %v844, 0.0
    %v857 = vadd.f32 %v855, %v856
    %v858 = vsel %vm848, %v845, 0.0
    %v859 = vadd.f32 %v857, %v858
    %v860 = vsel %vm848, %v846, 0.0
    %v861 = vadd.f32 %v859, %v860
    %v862 = vsel %vm848, %v847, 0.0
    %v863 = vadd.f32 %v861, %v862
    %864 = vadd.xlane.f32.xlu0 %v863
    %v865 = vpop.xlane.xlu0 %864
    %v866 = vrot.slane %v865, 4
    %v867 = vadd.f32 %v865, %v866
    %v868 = vrot.slane %v867, 2
    %v869 = vadd.f32 %v867, %v868
    %v870 = vrot.slane %v869, 1
    %v871 = vadd.f32 %v869, %v870
    %s872 = vtos %v871
    %v873 = vstv %s872
    %v874 = vadd.f32 %v831, %v873
    %vm875 = vcmask 0
    %876 = vst.msk [vmem:[#allocation10] sm:$0x1] %vm875, %v874
    %v877 = vld [vmem:[#allocation11] sm:$0x1]
    %v878 = vmul.f32 %v183, %v503
    %v879 = vmul.f32 %v184, %v504
    %v880 = vmul.f32 %v185, %v505
    %v881 = vmul.f32 %v186, %v506
    %v882 = vmul.f32 %v187, %v507
    %v883 = vmul.f32 %v188, %v508
    %v884 = vmul.f32 %v189, %v509
    %v885 = vmul.f32 %v190, %v510
    %v886 = vsel %vm848, %v878, 0.0
    %v887 = vsel %vm848, %v879, 0.0
    %v888 = vadd.f32 %v886, %v887
    %v889 = vsel %vm848, %v880, 0.0
    %v890 = vadd.f32 %v888, %v889
    %v891 = vsel %vm848, %v881, 0.0
    %v892 = vadd.f32 %v890, %v891
    %v893 = vsel %vm848, %v882, 0.0
    %v894 = vadd.f32 %v892, %v893
    %v895 = vsel %vm848, %v883, 0.0
    %v896 = vadd.f32 %v894, %v895
    %v897 = vsel %vm848, %v884, 0.0
    %v898 = vadd.f32 %v896, %v897
    %v899 = vsel %vm848, %v885, 0.0
    %v900 = vadd.f32 %v898, %v899
    %901 = vadd.xlane.f32.xlu0 %v900
    %v902 = vpop.xlane.xlu0 %901
    %v903 = vrot.slane %v902, 4
    %v904 = vadd.f32 %v902, %v903
    %v905 = vrot.slane %v904, 2
    %v906 = vadd.f32 %v904, %v905
    %v907 = vrot.slane %v906, 1
    %v908 = vadd.f32 %v906, %v907
    %s909 = vtos %v908
    %v910 = vstv %s909
    %v911 = vadd.f32 %v877, %v910
    %912 = vst.msk [vmem:[#allocation11] sm:$0x1] %vm875, %v911
    // Predicated region
    $region38: #{tpu_custom_call.1} parent=1 // pred_check
      _
    $region39: #{tpu_custom_call.1} parent=1 // pred_check_branch
      %914 = sbr.rel (0) target = $region41
    $region40: #{tpu_custom_call.1} parent=1 // pred_region
      %916 = vsyncadd [#allocation4], 0
      %s918 = sshll.u32 [#allocation10], 4
      %s919 = int_to_ptr.vmem [resolvable:$true] %s918
      %s920 = sshll.u32 %s4, 4
      %s921 = int_to_ptr.hbm [resolvable:$true] %s920
      %923 = dma.vmem_to_hbm [thread:$0]  %s919, 16, %s921, [#allocation4]
    $region41: #{tpu_custom_call.1} parent=1 // pred_fallthru
      _
    // Predicated region
    $region42: #{tpu_custom_call.1} parent=1 // pred_check
      _
    $region43: #{tpu_custom_call.1} parent=1 // pred_check_branch
      %925 = sbr.rel (0) target = $region45
    $region44: #{tpu_custom_call.1} parent=1 // pred_region
      %927 = vsyncadd [#allocation12], 0
      %s929 = sshll.u32 [#allocation11], 4
      %s930 = int_to_ptr.vmem [resolvable:$true] %s929
      %s931 = sshll.u32 %s5, 4
      %s932 = int_to_ptr.hbm [resolvable:$true] %s931
      %934 = dma.vmem_to_hbm [thread:$0]  %s930, 16, %s932, [#allocation12]
    $region45: #{tpu_custom_call.1} parent=1 // pred_fallthru
      _
    // Predicated region
    $region46: #{tpu_custom_call.1} parent=1 // pred_check
      _
    $region47: #{tpu_custom_call.1} parent=1 // pred_check_branch
      %936 = sbr.rel (0) target = $region49
    $region48: #{tpu_custom_call.1} parent=1 // pred_region
      %938 = dma.done [#allocation4], 16
    $region49: #{tpu_custom_call.1} parent=1 // pred_fallthru
      _
    // Predicated region
    $region50: #{tpu_custom_call.1} parent=1 // pred_check
      _
    $region51: #{tpu_custom_call.1} parent=1 // pred_check_branch
      %940 = sbr.rel (0) target = $region53
    $region52: #{tpu_custom_call.1} parent=1 // pred_region
      %942 = dma.done [#allocation12], 16
    $region53: #{tpu_custom_call.1} parent=1 // pred_fallthru
      _
    %943 = vsyncpa [#allocation3], 1
    %944 = vsyncpa [#allocation6], 1
    %945 = vsyncpa [#allocation9], 1
    %946 = vsyncpa [#allocation4], 1
    %947 = vsyncpa [#allocation12], 1

</llo_original>
